<compile_context>
chip_gen: v7x
topology: tpu7x:2x2x1
jax: 0.10.0
libtpu: 0.0.40
codegen_flags: <defaults>
</compile_context>

<pallas_src>
import functools

import jax
import jax.numpy as jnp
from jax.experimental import pallas as pl
from jax.experimental.pallas import tpu as pltpu

IN_DIM = 483
HID = 128
CARD_DIM = 75
ACT_DIM = 3
HEAD_DIM = CARD_DIM + ACT_DIM      # 78 valid columns in the fused head
HEAD_PAD = 128                     # lane-dense head output

MAX_BATCH_TILE = 1024              # rows per grid step for large batches
MIN_GRID_STEPS = 2                 # keep both v7x TensorCores busy when possible
SMALL_BATCH_XLA = 8                # below this, plain XLA GEMVs beat a kernel launch
_SMALL_TILES = (8, 32, 128)        # small-batch tile buckets (static jit arg)


def _round_up(n, m):
    return ((n + m - 1) // m) * m


# ----------------------------------------------------------------------------
# Kernel
# ----------------------------------------------------------------------------
def policy_kernel(x_ref, w1_ref, b1_ref, w2_ref, b2_ref, wh_ref, bh_ref, out_ref):
    # f32 -> bf16 cast in-kernel (free next to the DMA); MXU gets bf16 operands,
    # accumulation / bias-add / ReLU stay in f32.
    x = x_ref[...].astype(jnp.bfloat16)
    h1 = jnp.dot(x, w1_ref[...], preferred_element_type=jnp.float32)
    h1 = jnp.maximum(h1 + b1_ref[...], 0.0).astype(jnp.bfloat16)
    h2 = jnp.dot(h1, w2_ref[...], preferred_element_type=jnp.float32)
    h2 = jnp.maximum(h2 + b2_ref[...], 0.0).astype(jnp.bfloat16)
    head = jnp.dot(h2, wh_ref[...], preferred_element_type=jnp.float32) + bh_ref[...]
    out_ref[...] = head.astype(out_ref.dtype)


# ----------------------------------------------------------------------------
# Parameters
# ----------------------------------------------------------------------------
def init_params(key):
    """Deterministic init mimicking torch.nn.Linear default (U(-1/sqrt(fan_in), +))."""
    def linear(k, fan_in, fan_out):
        kw, kb = jax.random.split(k)
        bound = 1.0 / jnp.sqrt(fan_in)
        w = jax.random.uniform(kw, (fan_in, fan_out), jnp.float32, -bound, bound)
        b = jax.random.uniform(kb, (1, fan_out), jnp.float32, -bound, bound)
        return w, b

    k1, k2, k3, k4 = jax.random.split(key, 4)
    w1, b1 = linear(k1, IN_DIM, HID)
    w2, b2 = linear(k2, HID, HID)
    wc, bc = linear(k3, HID, CARD_DIM)
    wa, ba = linear(k4, HID, ACT_DIM)
    return dict(w1=w1, b1=b1, w2=w2, b2=b2, wc=wc, bc=bc, wa=wa, ba=ba)


def prepare_params(params):
    """One-time head-fusion / padding / bf16 conversion of the weights."""
    w_head = jnp.concatenate([params["wc"], params["wa"]], axis=1)   # (128, 78)
    b_head = jnp.concatenate([params["bc"], params["ba"]], axis=1)   # (1, 78)
    pad_cols = HEAD_PAD - HEAD_DIM
    return dict(
        w1=params["w1"].astype(jnp.bfloat16),                              # (483, 128)
        b1=params["b1"].astype(jnp.float32),                               # (1, 128)
        w2=params["w2"].astype(jnp.bfloat16),                              # (128, 128)
        b2=params["b2"].astype(jnp.float32),                               # (1, 128)
        wh=jnp.pad(w_head, ((0, 0), (0, pad_cols))).astype(jnp.bfloat16),  # (128, 128)
        bh=jnp.pad(b_head, ((0, 0), (0, pad_cols))).astype(jnp.float32),   # (1, 128)
    )


# ----------------------------------------------------------------------------
# Forward
# ----------------------------------------------------------------------------
def _choose_batch_tile(batch):
    # Step count: enough to respect MAX_BATCH_TILE, and >= MIN_GRID_STEPS whenever
    # each v7x TensorCore can get a useful (>= 8 row) tile.
    n_steps = max(pl.cdiv(batch, MAX_BATCH_TILE),
                  MIN_GRID_STEPS if batch >= 2 * _SMALL_TILES[0] else 1)
    ideal = pl.cdiv(batch, n_steps)
    # Bucket (static jit arg) so variable batch sizes don't recompile per size.
    for t in _SMALL_TILES:
        if ideal <= t:
            return t
    return min(MAX_BATCH_TILE, _round_up(ideal, 128))


def _split_head(head):
    c = head[:, :CARD_DIM]
    a = head[:, CARD_DIM:HEAD_DIM]
    # Constant tensor built in the torch forward: ones(14,5); [:,1:] -= 1000.
    trade_tensor = jnp.ones((14, 5), jnp.float32).at[:, 1:].add(-1000.0)
    return c, trade_tensor, a


@functools.partial(jax.jit, static_argnames=("batch_tile", "out_dtype"))
def _forward_pallas(prep, x, batch_tile, out_dtype):
    batch = x.shape[0]
    grid = (pl.cdiv(batch, batch_tile),)   # ragged tail block handled by Pallas

    const = lambda i: (0, 0)   # weights: same block every step -> VMEM-resident
    head = pl.pallas_call(
        policy_kernel,
        out_shape=jax.ShapeDtypeStruct((batch, HEAD_PAD), out_dtype),
        grid=grid,
        in_specs=[
            pl.BlockSpec((batch_tile, IN_DIM), lambda i: (i, 0)),
            pl.BlockSpec((IN_DIM, HID), const),
            pl.BlockSpec((1, HID), const),
            pl.BlockSpec((HID, HID), const),
            pl.BlockSpec((1, HID), const),
            pl.BlockSpec((HID, HEAD_PAD), const),
            pl.BlockSpec((1, HEAD_PAD), const),
        ],
        out_specs=pl.BlockSpec((batch_tile, HEAD_PAD), lambda i: (i, 0)),
        compiler_params=pltpu.CompilerParams(
            dimension_semantics=("parallel",)),
    )(x, prep["w1"], prep["b1"], prep["w2"], prep["b2"], prep["wh"], prep["bh"])
    return _split_head(head)


@functools.partial(jax.jit, static_argnames=("out_dtype",))
def _forward_xla(prep, x, out_dtype):
    # Tiny-batch online-inference path: let XLA fuse the three GEMVs and skip
    # the pallas_call launch + per-call weight DMA.
    xb = x.astype(jnp.bfloat16)
    h1 = jnp.maximum(
        jnp.dot(xb, prep["w1"], preferred_element_type=jnp.float32) + prep["b1"], 0.0)
    h2 = jnp.maximum(
        jnp.dot(h1.astype(jnp.bfloat16), prep["w2"],
                preferred_element_type=jnp.float32) + prep["b2"], 0.0)
    head = (jnp.dot(h2.astype(jnp.bfloat16), prep["wh"],
                    preferred_element_type=jnp.float32) + prep["bh"]).astype(out_dtype)
    return _split_head(head)


def policy_forward(prepared_params, x, *, out_dtype=jnp.float32,
                   small_batch_xla=False):
    if small_batch_xla and x.shape[0] <= SMALL_BATCH_XLA:
        return _forward_xla(prepared_params, x, out_dtype)
    return _forward_pallas(prepared_params, x,
                           _choose_batch_tile(x.shape[0]), out_dtype)


def reference_forward(params, x):
    h1 = jnp.maximum(x @ params["w1"] + params["b1"], 0.0)
    h2 = jnp.maximum(h1 @ params["w2"] + params["b2"], 0.0)
    c = h2 @ params["wc"] + params["bc"]
    a = h2 @ params["wa"] + params["ba"]
    trade_tensor = jnp.ones((14, 5), jnp.float32).at[:, 1:].add(-1000.0)
    return c, trade_tensor, a


if __name__ == "__main__":
    key = jax.random.PRNGKey(0)
    kp, kx1, kx2 = jax.random.split(key, 3)
    params = init_params(kp)
    prepared = prepare_params(params)           # one-time fusion / padding / bf16

    # Small (online-inference style) batch through the Pallas kernel.
    batch = 2
    x = jax.random.normal(kx1, (batch, IN_DIM), jnp.float32)
    c, trade_tensor, a = policy_forward(prepared, x)
    jax.block_until_ready((c, trade_tensor, a))

    c_ref, t_ref, a_ref = reference_forward(params, x)
    assert c.shape == (batch, CARD_DIM) and a.shape == (batch, ACT_DIM)
    assert trade_tensor.shape == (14, 5)
    assert jnp.allclose(c, c_ref, atol=5e-2, rtol=5e-2)
    assert jnp.allclose(a, a_ref, atol=5e-2, rtol=5e-2)
    assert jnp.allclose(trade_tensor, t_ref)

    # Larger batch: exercises a 2-step grid (v7x megacore) with a ragged tail block.
    batch2 = 200
    x2 = jax.random.normal(kx2, (batch2, IN_DIM), jnp.float32)
    c2, _, a2 = policy_forward(prepared, x2)
    jax.block_until_ready((c2, a2))
    c2_ref, _, a2_ref = reference_forward(params, x2)
    assert jnp.allclose(c2, c2_ref, atol=5e-2, rtol=5e-2)
    assert jnp.allclose(a2, a2_ref, atol=5e-2, rtol=5e-2)

    # TODO(synk): train_net (REINFORCE update with Adam) is training logic, not
    # part of the forward pass; not implemented as a kernel.
    print("KERNEL_OK")
</pallas_src>

<mosaic_0001>
module attributes {stable_mosaic.version = 11 : i64} {
  func.func @policy_kernel(%arg0: i32, %arg1: memref<8x483xf32, #tpu.memory_space<vmem>>, %arg2: memref<483x128xbf16, #tpu.memory_space<vmem>>, %arg3: memref<1x128xf32, #tpu.memory_space<vmem>>, %arg4: memref<128x128xbf16, #tpu.memory_space<vmem>>, %arg5: memref<1x128xf32, #tpu.memory_space<vmem>>, %arg6: memref<128x128xbf16, #tpu.memory_space<vmem>>, %arg7: memref<1x128xf32, #tpu.memory_space<vmem>>, %arg8: memref<8x128xf32, #tpu.memory_space<vmem>>) attributes {dimension_semantics = [#tpu.dimension_semantics<parallel>], iteration_bounds = array<i64: 1>, scalar_prefetch = 0 : i64, scratch_operands = 0 : i64, tpu.core_type = #tpu.core_type<tc>, window_params = [{transform_indices = @transform_0, window_bounds = array<i64: 8, 483>}, {pipeline_mode = #tpu.pipeline_mode<synchronous>, transform_indices = @transform_1, window_bounds = array<i64: 483, 128>}, {pipeline_mode = #tpu.pipeline_mode<synchronous>, transform_indices = @transform_2, window_bounds = array<i64: 1, 128>}, {pipeline_mode = #tpu.pipeline_mode<synchronous>, transform_indices = @transform_3, window_bounds = array<i64: 128, 128>}, {pipeline_mode = #tpu.pipeline_mode<synchronous>, transform_indices = @transform_4, window_bounds = array<i64: 1, 128>}, {pipeline_mode = #tpu.pipeline_mode<synchronous>, transform_indices = @transform_5, window_bounds = array<i64: 128, 128>}, {pipeline_mode = #tpu.pipeline_mode<synchronous>, transform_indices = @transform_6, window_bounds = array<i64: 1, 128>}, {transform_indices = @transform_7, window_bounds = array<i64: 8, 128>}]} {
    %c0 = arith.constant 0 : index
    %c0_0 = arith.constant 0 : index
    %0 = vector.load %arg1[%c0, %c0_0] : memref<8x483xf32, #tpu.memory_space<vmem>>, vector<8x483xf32>
    %1 = arith.truncf %0 : vector<8x483xf32> to vector<8x483xbf16>
    %c0_1 = arith.constant 0 : index
    %c0_2 = arith.constant 0 : index
    %2 = vector.load %arg2[%c0_1, %c0_2] : memref<483x128xbf16, #tpu.memory_space<vmem>>, vector<483x128xbf16>
    %cst = arith.constant dense<0.000000e+00> : vector<8x128xf32>
    %3 = tpu.matmul %1, %2, %cst {dimension_numbers = #tpu.dot_dimension_numbers<[1], [0], [0], [1], [0, 0, 1, 1], [], []>} : vector<8x483xbf16>, vector<483x128xbf16>, vector<8x128xf32> -> vector<8x128xf32>
    %c0_3 = arith.constant 0 : index
    %c0_4 = arith.constant 0 : index
    %4 = vector.load %arg3[%c0_3, %c0_4] : memref<1x128xf32, #tpu.memory_space<vmem>>, vector<1x128xf32>
    %5 = vector.broadcast %4 : vector<1x128xf32> to vector<8x128xf32>
    %6 = arith.addf %3, %5 : vector<8x128xf32>
    %cst_5 = arith.constant 0.000000e+00 : f32
    %7 = vector.broadcast %cst_5 : f32 to vector<8x128xf32>
    %8 = arith.maximumf %6, %7 : vector<8x128xf32>
    %9 = arith.truncf %8 : vector<8x128xf32> to vector<8x128xbf16>
    %c0_6 = arith.constant 0 : index
    %c0_7 = arith.constant 0 : index
    %10 = vector.load %arg4[%c0_6, %c0_7] : memref<128x128xbf16, #tpu.memory_space<vmem>>, vector<128x128xbf16>
    %cst_8 = arith.constant dense<0.000000e+00> : vector<8x128xf32>
    %11 = tpu.matmul %9, %10, %cst_8 {dimension_numbers = #tpu.dot_dimension_numbers<[1], [0], [0], [1], [0, 0, 1, 1], [], []>} : vector<8x128xbf16>, vector<128x128xbf16>, vector<8x128xf32> -> vector<8x128xf32>
    %c0_9 = arith.constant 0 : index
    %c0_10 = arith.constant 0 : index
    %12 = vector.load %arg5[%c0_9, %c0_10] : memref<1x128xf32, #tpu.memory_space<vmem>>, vector<1x128xf32>
    %13 = vector.broadcast %12 : vector<1x128xf32> to vector<8x128xf32>
    %14 = arith.addf %11, %13 : vector<8x128xf32>
    %cst_11 = arith.constant 0.000000e+00 : f32
    %15 = vector.broadcast %cst_11 : f32 to vector<8x128xf32>
    %16 = arith.maximumf %14, %15 : vector<8x128xf32>
    %17 = arith.truncf %16 : vector<8x128xf32> to vector<8x128xbf16>
    %c0_12 = arith.constant 0 : index
    %c0_13 = arith.constant 0 : index
    %18 = vector.load %arg6[%c0_12, %c0_13] : memref<128x128xbf16, #tpu.memory_space<vmem>>, vector<128x128xbf16>
    %cst_14 = arith.constant dense<0.000000e+00> : vector<8x128xf32>
    %19 = tpu.matmul %17, %18, %cst_14 {dimension_numbers = #tpu.dot_dimension_numbers<[1], [0], [0], [1], [0, 0, 1, 1], [], []>} : vector<8x128xbf16>, vector<128x128xbf16>, vector<8x128xf32> -> vector<8x128xf32>
    %c0_15 = arith.constant 0 : index
    %c0_16 = arith.constant 0 : index
    %20 = vector.load %arg7[%c0_15, %c0_16] : memref<1x128xf32, #tpu.memory_space<vmem>>, vector<1x128xf32>
    %21 = vector.broadcast %20 : vector<1x128xf32> to vector<8x128xf32>
    %22 = arith.addf %19, %21 : vector<8x128xf32>
    %c0_17 = arith.constant 0 : index
    %c0_18 = arith.constant 0 : index
    %23 = vector.load %arg8[%c0_17, %c0_18] : memref<8x128xf32, #tpu.memory_space<vmem>>, vector<8x128xf32>
    tpu.vector_store %arg8[%c0_17, %c0_18], %22 {strides = array<i32>} : memref<8x128xf32, #tpu.memory_space<vmem>>, vector<8x128xf32>,
    return
  }
  func.func @transform_0(%arg0: i32) -> (i32, i32) {
    %c0_i32 = arith.constant 0 : i32
    %c0_i32_0 = arith.constant 0 : i32
    return %arg0, %c0_i32 : i32, i32
  }
  func.func @transform_1(%arg0: i32) -> (i32, i32) {
    %c0_i32 = arith.constant 0 : i32
    %c0_i32_0 = arith.constant 0 : i32
    %c0_i32_1 = arith.constant 0 : i32
    return %c0_i32, %c0_i32_0 : i32, i32
  }
  func.func @transform_2(%arg0: i32) -> (i32, i32) {
    %c0_i32 = arith.constant 0 : i32
    %c0_i32_0 = arith.constant 0 : i32
    %c0_i32_1 = arith.constant 0 : i32
    return %c0_i32, %c0_i32_0 : i32, i32
  }
  func.func @transform_3(%arg0: i32) -> (i32, i32) {
    %c0_i32 = arith.constant 0 : i32
    %c0_i32_0 = arith.constant 0 : i32
    %c0_i32_1 = arith.constant 0 : i32
    return %c0_i32, %c0_i32_0 : i32, i32
  }
  func.func @transform_4(%arg0: i32) -> (i32, i32) {
    %c0_i32 = arith.constant 0 : i32
    %c0_i32_0 = arith.constant 0 : i32
    %c0_i32_1 = arith.constant 0 : i32
    return %c0_i32, %c0_i32_0 : i32, i32
  }
  func.func @transform_5(%arg0: i32) -> (i32, i32) {
    %c0_i32 = arith.constant 0 : i32
    %c0_i32_0 = arith.constant 0 : i32
    %c0_i32_1 = arith.constant 0 : i32
    return %c0_i32, %c0_i32_0 : i32, i32
  }
  func.func @transform_6(%arg0: i32) -> (i32, i32) {
    %c0_i32 = arith.constant 0 : i32
    %c0_i32_0 = arith.constant 0 : i32
    %c0_i32_1 = arith.constant 0 : i32
    return %c0_i32, %c0_i32_0 : i32, i32
  }
  func.func @transform_7(%arg0: i32) -> (i32, i32) {
    %c0_i32 = arith.constant 0 : i32
    %c0_i32_0 = arith.constant 0 : i32
    return %arg0, %c0_i32 : i32, i32
  }
}

</mosaic_0001>

<llo_original>
// kernel: _forward_pallas.1
$region0: #{_forward_pallas.1}
  #allocation0 [shape = 'u32[]', space=smem, size = 0x4, offset = 0x4, fixed_abs, tag = 'smem constant byte address 0x4 - core index']
  #allocation1 [shape = 'u32[144,128]{1,0:T(1,128)}', space=vmem, size = 0x12000, scoped, tag = 'internal scratch']
  %s0 = inlined_call_operand.vmem [shape: f32[2,483], index: 0, kind: input, shape index: {}]
  %s1 = inlined_call_operand.hbm [shape: bf16[483,128], index: 1, kind: input, shape index: {}]
  %s2 = inlined_call_operand.hbm [shape: f32[1,128], index: 2, kind: input, shape index: {}]
  %s3 = inlined_call_operand.hbm [shape: bf16[128,128], index: 3, kind: input, shape index: {}]
  %s4 = inlined_call_operand.vmem [shape: f32[1,128], index: 4, kind: input, shape index: {}]
  %s5 = inlined_call_operand.hbm [shape: bf16[128,128], index: 5, kind: input, shape index: {}]
  %s6 = inlined_call_operand.vmem [shape: f32[1,128], index: 6, kind: input, shape index: {}]
  %s7 = inlined_call_operand.vmem [shape: f32[2,128], index: 7, kind: output, shape index: {}]
  %s8 = sld [smem:[#allocation0]]
  $region84: #{_forward_pallas.1} parent=0
    _
  %s10 = ssub.s32 1, %s8
  %s11 = scalar_select 0, %s10, %s8
  $region1: #{_forward_pallas.1} parent=0
    #allocation2 [shape = 'u8[124928]{0}', space=vmem, size = 0x1e800, scoped, tag = 'input window, operand 1, single buffered']
    #allocation3 [shape = 's32[1]{0}', space=sflag, size = 0x4, scoped, tag = 'scoped memory for _forward_pallas.1']
    #allocation4 [shape = 'u8[512]{0}', space=vmem, size = 0x400, scoped, tag = 'input window, operand 2, single buffered']
    #allocation5 [shape = 's32[1]{0}', space=sflag, size = 0x4, scoped, tag = 'scoped memory for _forward_pallas.1']
    #allocation6 [shape = 'u8[32768]{0}', space=vmem, size = 0x8000, scoped, tag = 'input window, operand 3, single buffered']
    #allocation7 [shape = 'u8[32768]{0}', space=vmem, size = 0x8000, scoped, tag = 'input window, operand 5, single buffered']
    #allocation8 [shape = 's32[1]{0}', space=sflag, size = 0x4, scoped, tag = 'scoped memory for _forward_pallas.1']
    #allocation9 [shape = 'u8[4096]{0}', space=vmem, size = 0x1000, scoped, tag = 'output window, operand 0, single buffered']
    %12 = vsyncpa [#allocation3], 0
    %13 = vsyncpa [#allocation5], 0
    %14 = vsyncpa [#allocation8], 0
    // Predicated region
    $region2: #{_forward_pallas.1} parent=1 // pred_check
      _
    $region3: #{_forward_pallas.1} parent=1 // pred_check_branch
      %16 = sbr.rel (0) target = $region5
    $region4: #{_forward_pallas.1} parent=1 // pred_region
      _
    $region5: #{_forward_pallas.1} parent=1 // pred_fallthru
      _
    // Predicated region
    $region6: #{_forward_pallas.1} parent=1 // pred_check
      _
    $region7: #{_forward_pallas.1} parent=1 // pred_check_branch
      %18 = sbr.rel (0) target = $region9
    $region8: #{_forward_pallas.1} parent=1 // pred_region
      %s20 = ssub.s32 3904, 3904
      %21 = vsyncadd [#allocation3], %s20
      %s22 = sshll.u32 [#allocation2], 4
      %s23 = int_to_ptr.vmem [resolvable:$true] %s22
      %28 = dma.hbm_to_vmem [thread:$0]  %s1, 3904, %s23, [#allocation3], 64, 64, 4
    $region9: #{_forward_pallas.1} parent=1 // pred_fallthru
      _
    // Predicated region
    $region10: #{_forward_pallas.1} parent=1 // pred_check
      _
    $region11: #{_forward_pallas.1} parent=1 // pred_check_branch
      %30 = sbr.rel (0) target = $region13
    $region12: #{_forward_pallas.1} parent=1 // pred_region
      %s32 = ssub.s32 16, 16
      %33 = vsyncadd [#allocation5], %s32
      %s35 = sshll.u32 [#allocation4], 4
      %s36 = int_to_ptr.vmem [resolvable:$true] %s35
      %38 = dma.hbm_to_vmem [thread:$0]  %s2, 16, %s36, [#allocation5]
    $region13: #{_forward_pallas.1} parent=1 // pred_fallthru
      _
    // Predicated region
    $region14: #{_forward_pallas.1} parent=1 // pred_check
      _
    $region15: #{_forward_pallas.1} parent=1 // pred_check_branch
      %40 = sbr.rel (0) target = $region17
    $region16: #{_forward_pallas.1} parent=1 // pred_region
      %s42 = ssub.s32 1024, 1024
      %43 = vsyncadd [#allocation5], %s42
      %s44 = sshll.u32 [#allocation6], 4
      %s45 = int_to_ptr.vmem [resolvable:$true] %s44
      %50 = dma.hbm_to_vmem [thread:$0]  %s3, 1024, %s45, [#allocation5], 64, 64, 4
    $region17: #{_forward_pallas.1} parent=1 // pred_fallthru
      _
    // Predicated region
    $region18: #{_forward_pallas.1} parent=1 // pred_check
      _
    $region19: #{_forward_pallas.1} parent=1 // pred_check_branch
      %52 = sbr.rel (0) target = $region21
    $region20: #{_forward_pallas.1} parent=1 // pred_region
      _
    $region21: #{_forward_pallas.1} parent=1 // pred_fallthru
      _
    // Predicated region
    $region22: #{_forward_pallas.1} parent=1 // pred_check
      _
    $region23: #{_forward_pallas.1} parent=1 // pred_check_branch
      %54 = sbr.rel (0) target = $region25
    $region24: #{_forward_pallas.1} parent=1 // pred_region
      %s56 = ssub.s32 1024, 1024
      %57 = vsyncadd [#allocation8], %s56
      %s58 = sshll.u32 [#allocation7], 4
      %s59 = int_to_ptr.vmem [resolvable:$true] %s58
      %64 = dma.hbm_to_vmem [thread:$0]  %s5, 1024, %s59, [#allocation8], 64, 64, 4
    $region25: #{_forward_pallas.1} parent=1 // pred_fallthru
      _
    // Predicated region
    $region26: #{_forward_pallas.1} parent=1 // pred_check
      _
    $region27: #{_forward_pallas.1} parent=1 // pred_check_branch
      %66 = sbr.rel (0) target = $region29
    $region28: #{_forward_pallas.1} parent=1 // pred_region
      _
    $region29: #{_forward_pallas.1} parent=1 // pred_fallthru
      _
    // Predicated region
    $region30: #{_forward_pallas.1} parent=1 // pred_check
      _
    $region31: #{_forward_pallas.1} parent=1 // pred_check_branch
      %68 = sbr.rel (0) target = $region33
    $region32: #{_forward_pallas.1} parent=1 // pred_region
      %69 = dma.done [#allocation3], 3904
    $region33: #{_forward_pallas.1} parent=1 // pred_fallthru
      _
    // Predicated region
    $region34: #{_forward_pallas.1} parent=1 // pred_check
      _
    $region35: #{_forward_pallas.1} parent=1 // pred_check_branch
      %71 = sbr.rel (0) target = $region37
    $region36: #{_forward_pallas.1} parent=1 // pred_region
      %72 = dma.done [#allocation5], 16
    $region37: #{_forward_pallas.1} parent=1 // pred_fallthru
      _
    // Predicated region
    $region38: #{_forward_pallas.1} parent=1 // pred_check
      _
    $region39: #{_forward_pallas.1} parent=1 // pred_check_branch
      %74 = sbr.rel (0) target = $region41
    $region40: #{_forward_pallas.1} parent=1 // pred_region
      %75 = dma.done [#allocation5], 1024
    $region41: #{_forward_pallas.1} parent=1 // pred_fallthru
      _
    // Predicated region
    $region42: #{_forward_pallas.1} parent=1 // pred_check
      _
    $region43: #{_forward_pallas.1} parent=1 // pred_check_branch
      %77 = sbr.rel (0) target = $region45
    $region44: #{_forward_pallas.1} parent=1 // pred_region
      %78 = dma.done [#allocation8], 1024
    $region45: #{_forward_pallas.1} parent=1 // pred_fallthru
      _
    %v80 = vld [vmem:[%s0] sm:$0xff]
    %v81 = vld [vmem:[%s0 + $0x8] sm:$0xff]
    %v82 = vld [vmem:[%s0 + $0x10] sm:$0xff]
    %v83 = vld [vmem:[%s0 + $0x18] sm:$0xff]
    %v88 = vcombine.low %v80, %v81
    %v89 = vcombine.high %v80, %v81
    %v90 = vcombine.low %v82, %v83
    %v91 = vcombine.high %v82, %v83
    %v93 = vunpack.c.l.s4 1983009808
    %v94 = vunpack.c.0.s8 %v93
    %v95 = vlaneseq
    %v96 = vshrl.u32 %v95, 7
    %v97 = vsub.s32 %v94, %v96
    %v98 = vrot.slane %v88, %v97
    %v100 = vunpack.c.l.s4 1983009808
    %v101 = vunpack.c.0.s8 %v100
    %v102 = vlaneseq
    %v103 = vshrl.u32 %v102, 7
    %v104 = vsub.s32 %v101, %v103
    %v105 = vrot.slane %v89, %v104
    %v107 = vunpack.c.l.s4 1983009808
    %v108 = vunpack.c.0.s8 %v107
    %v109 = vlaneseq
    %v110 = vshrl.u32 %v109, 7
    %v111 = vsub.s32 %v108, %v110
    %v112 = vrot.slane %v90, %v111
    %v114 = vunpack.c.l.s4 1983009808
    %v115 = vunpack.c.0.s8 %v114
    %v116 = vlaneseq
    %v117 = vshrl.u32 %v116, 7
    %v118 = vsub.s32 %v115, %v117
    %v119 = vrot.slane %v91, %v118
    %v120 = vcombine.low %v98, %v112
    %v121 = vcombine.high %v98, %v112
    %v122 = vcombine.low %v105, %v119
    %v123 = vcombine.high %v105, %v119
    %v128 = vpack.c.bf16 %v120, %v120
    %v129 = vpack.c.bf16 %v121, %v121
    %v130 = vpack.c.bf16 %v122, %v122
    %v131 = vpack.c.bf16 %v123, %v123
    %v132 = vld [vmem:[#allocation2] sm:$0xf]
    %v133 = vld [vmem:[#allocation2 + $0x4] sm:$0xf]
    %v134 = vld [vmem:[#allocation2 + $0x8] sm:$0xf]
    %v135 = vld [vmem:[#allocation2 + $0xc] sm:$0xf]
    %v136 = vld [vmem:[#allocation2 + $0x10] sm:$0xf]
    %v137 = vld [vmem:[#allocation2 + $0x14] sm:$0xf]
    %v138 = vld [vmem:[#allocation2 + $0x18] sm:$0xf]
    %v139 = vld [vmem:[#allocation2 + $0x1c] sm:$0xf]
    %v140 = vld [vmem:[#allocation2 + $0x20] sm:$0xf]
    %v141 = vld [vmem:[#allocation2 + $0x24] sm:$0xf]
    %v142 = vld [vmem:[#allocation2 + $0x28] sm:$0xf]
    %v143 = vld [vmem:[#allocation2 + $0x2c] sm:$0xf]
    %v144 = vld [vmem:[#allocation2 + $0x30] sm:$0xf]
    %v145 = vld [vmem:[#allocation2 + $0x34] sm:$0xf]
    %v146 = vld [vmem:[#allocation2 + $0x38] sm:$0xf]
    %v147 = vld [vmem:[#allocation2 + $0x3c] sm:$0xf]
    %v148 = vld [vmem:[#allocation2 + $0x40] sm:$0xf]
    %v149 = vld [vmem:[#allocation2 + $0x44] sm:$0xf]
    %v150 = vld [vmem:[#allocation2 + $0x48] sm:$0xf]
    %v151 = vld [vmem:[#allocation2 + $0x4c] sm:$0xf]
    %v152 = vld [vmem:[#allocation2 + $0x50] sm:$0xf]
    %v153 = vld [vmem:[#allocation2 + $0x54] sm:$0xf]
    %v154 = vld [vmem:[#allocation2 + $0x58] sm:$0xf]
    %v155 = vld [vmem:[#allocation2 + $0x5c] sm:$0xf]
    %v156 = vld [vmem:[#allocation2 + $0x60] sm:$0xf]
    %v157 = vld [vmem:[#allocation2 + $0x64] sm:$0xf]
    %v158 = vld [vmem:[#allocation2 + $0x68] sm:$0xf]
    %v159 = vld [vmem:[#allocation2 + $0x6c] sm:$0xf]
    %v160 = vld [vmem:[#allocation2 + $0x70] sm:$0xf]
    %v161 = vld [vmem:[#allocation2 + $0x74] sm:$0xf]
    %v162 = vld [vmem:[#allocation2 + $0x78] sm:$0xf]
    %v163 = vld [vmem:[#allocation2 + $0x7c] sm:$0xf]
    %v164 = vld [vmem:[#allocation2 + $0x80] sm:$0xf]
    %v165 = vld [vmem:[#allocation2 + $0x84] sm:$0xf]
    %v166 = vld [vmem:[#allocation2 + $0x88] sm:$0xf]
    %v167 = vld [vmem:[#allocation2 + $0x8c] sm:$0xf]
    %v168 = vld [vmem:[#allocation2 + $0x90] sm:$0xf]
    %v169 = vld [vmem:[#allocation2 + $0x94] sm:$0xf]
    %v170 = vld [vmem:[#allocation2 + $0x98] sm:$0xf]
    %v171 = vld [vmem:[#allocation2 + $0x9c] sm:$0xf]
    %v172 = vld [vmem:[#allocation2 + $0xa0] sm:$0xf]
    %v173 = vld [vmem:[#allocation2 + $0xa4] sm:$0xf]
    %v174 = vld [vmem:[#allocation2 + $0xa8] sm:$0xf]
    %v175 = vld [vmem:[#allocation2 + $0xac] sm:$0xf]
    %v176 = vld [vmem:[#allocation2 + $0xb0] sm:$0xf]
    %v177 = vld [vmem:[#allocation2 + $0xb4] sm:$0xf]
    %v178 = vld [vmem:[#allocation2 + $0xb8] sm:$0xf]
    %v179 = vld [vmem:[#allocation2 + $0xbc] sm:$0xf]
    %v180 = vld [vmem:[#allocation2 + $0xc0] sm:$0xf]
    %v181 = vld [vmem:[#allocation2 + $0xc4] sm:$0xf]
    %v182 = vld [vmem:[#allocation2 + $0xc8] sm:$0xf]
    %v183 = vld [vmem:[#allocation2 + $0xcc] sm:$0xf]
    %v184 = vld [vmem:[#allocation2 + $0xd0] sm:$0xf]
    %v185 = vld [vmem:[#allocation2 + $0xd4] sm:$0xf]
    %v186 = vld [vmem:[#allocation2 + $0xd8] sm:$0xf]
    %v187 = vld [vmem:[#allocation2 + $0xdc] sm:$0xf]
    %v188 = vld [vmem:[#allocation2 + $0xe0] sm:$0xf]
    %v189 = vld [vmem:[#allocation2 + $0xe4] sm:$0xf]
    %v190 = vld [vmem:[#allocation2 + $0xe8] sm:$0xf]
    %v191 = vld [vmem:[#allocation2 + $0xec] sm:$0xf]
    %v192 = vld [vmem:[#allocation2 + $0xf0] sm:$0x3]
    %v193 = vld [vmem:[#allocation4] sm:$0x1]
    %v195 = vlaneseq
    %v196 = vshrl.u32 %v195, 7
    %v197 = vsub.s32 0, %v196
    %v198 = vrot.slane %v193, %v197
    %v261 = vunpack.c.l.b16 %v132
    %v262 = vunpack.c.l.b16 %v133
    %v263 = vunpack.c.l.b16 %v134
    %v264 = vunpack.c.l.b16 %v135
    %v265 = vunpack.c.l.b16 %v136
    %v266 = vunpack.c.l.b16 %v137
    %v267 = vunpack.c.l.b16 %v138
    %v268 = vunpack.c.l.b16 %v139
    %v269 = vunpack.c.l.b16 %v140
    %v270 = vunpack.c.l.b16 %v141
    %v271 = vunpack.c.l.b16 %v142
    %v272 = vunpack.c.l.b16 %v143
    %v273 = vunpack.c.l.b16 %v144
    %v274 = vunpack.c.l.b16 %v145
    %v275 = vunpack.c.l.b16 %v146
    %v276 = vunpack.c.l.b16 %v147
    %v277 = vunpack.c.l.b16 %v148
    %v278 = vunpack.c.l.b16 %v149
    %v279 = vunpack.c.l.b16 %v150
    %v280 = vunpack.c.l.b16 %v151
    %v281 = vunpack.c.l.b16 %v152
    %v282 = vunpack.c.l.b16 %v153
    %v283 = vunpack.c.l.b16 %v154
    %v284 = vunpack.c.l.b16 %v155
    %v285 = vunpack.c.l.b16 %v156
    %v286 = vunpack.c.l.b16 %v157
    %v287 = vunpack.c.l.b16 %v158
    %v288 = vunpack.c.l.b16 %v159
    %v289 = vunpack.c.l.b16 %v160
    %v290 = vunpack.c.l.b16 %v161
    %v291 = vunpack.c.l.b16 %v162
    %v292 = vunpack.c.l.b16 %v163
    %v293 = vunpack.c.l.b16 %v164
    %v294 = vunpack.c.l.b16 %v165
    %v295 = vunpack.c.l.b16 %v166
    %v296 = vunpack.c.l.b16 %v167
    %v297 = vunpack.c.l.b16 %v168
    %v298 = vunpack.c.l.b16 %v169
    %v299 = vunpack.c.l.b16 %v170
    %v300 = vunpack.c.l.b16 %v171
    %v301 = vunpack.c.l.b16 %v172
    %v302 = vunpack.c.l.b16 %v173
    %v303 = vunpack.c.l.b16 %v174
    %v304 = vunpack.c.l.b16 %v175
    %v305 = vunpack.c.l.b16 %v176
    %v306 = vunpack.c.l.b16 %v177
    %v307 = vunpack.c.l.b16 %v178
    %v308 = vunpack.c.l.b16 %v179
    %v309 = vunpack.c.l.b16 %v180
    %v310 = vunpack.c.l.b16 %v181
    %v311 = vunpack.c.l.b16 %v182
    %v312 = vunpack.c.l.b16 %v183
    %v313 = vunpack.c.l.b16 %v184
    %v314 = vunpack.c.l.b16 %v185
    %v315 = vunpack.c.l.b16 %v186
    %v316 = vunpack.c.l.b16 %v187
    %v317 = vunpack.c.l.b16 %v188
    %v318 = vunpack.c.l.b16 %v189
    %v319 = vunpack.c.l.b16 %v190
    %v320 = vunpack.c.l.b16 %v191
    %v321 = vunpack.c.l.b16 %v192
    %v322 = vpack.c.b16 %v262, %v261
    %v323 = vpack.c.b16 %v264, %v263
    %v324 = vpack.c.b16 %v266, %v265
    %v325 = vpack.c.b16 %v268, %v267
    %v326 = vpack.c.b16 %v270, %v269
    %v327 = vpack.c.b16 %v272, %v271
    %v328 = vpack.c.b16 %v274, %v273
    %v329 = vpack.c.b16 %v276, %v275
    %v330 = vpack.c.b16 %v278, %v277
    %v331 = vpack.c.b16 %v280, %v279
    %v332 = vpack.c.b16 %v282, %v281
    %v333 = vpack.c.b16 %v284, %v283
    %v334 = vpack.c.b16 %v286, %v285
    %v335 = vpack.c.b16 %v288, %v287
    %v336 = vpack.c.b16 %v290, %v289
    %v337 = vpack.c.b16 %v292, %v291
    %v338 = vpack.c.b16 %v294, %v293
    %v339 = vpack.c.b16 %v296, %v295
    %v340 = vpack.c.b16 %v298, %v297
    %v341 = vpack.c.b16 %v300, %v299
    %v342 = vpack.c.b16 %v302, %v301
    %v343 = vpack.c.b16 %v304, %v303
    %v344 = vpack.c.b16 %v306, %v305
    %v345 = vpack.c.b16 %v308, %v307
    %v346 = vpack.c.b16 %v310, %v309
    %v347 = vpack.c.b16 %v312, %v311
    %v348 = vpack.c.b16 %v314, %v313
    %v349 = vpack.c.b16 %v316, %v315
    %v350 = vpack.c.b16 %v318, %v317
    %v351 = vpack.c.b16 %v320, %v319
    %v352 = vpack.c.b16 %v321, %v321
    %vm383 = vcmask 809984
    %v385 = vsel %vm383, %v131, 0
    %vm387 = vcmask 1040384
    %vm388 = vcmask 1041408
    %v389 = vsel %vm387, 4294967295, 65535
    %v390 = vsel %vm388, %v389, 0
    %v392 = vand.u32 %v352, %v390
    %394 = vmatprep.subr.bf16.mxu0 0
    %395 = vmatpush1.bf16.msra.mxu0 %v322
    %396 = vmatprep.subr.bf16.mxu0 0
    %397 = vmatpush1.bf16.msra.mxu0 %v323
    %398 = vmatprep.subr.bf16.mxu0 0
    %399 = vmatpush1.bf16.msra.mxu0 %v324
    %400 = vmatprep.subr.bf16.mxu0 0
    %401 = vmatpush1.bf16.msra.mxu0 %v325
    %402 = vmatprep.subr.bf16.mxu0 0
    %403 = vmatpush1.bf16.msra.mxu0 %v326
    %404 = vmatprep.subr.bf16.mxu0 0
    %405 = vmatpush1.bf16.msra.mxu0 %v327
    %406 = vmatprep.subr.bf16.mxu0 0
    %407 = vmatpush1.bf16.msra.mxu0 %v328
    %408 = vmatprep.subr.bf16.mxu0 0
    %409 = vmatpush1.bf16.msra.mxu0 %v329
    %410 = vmatprep.subr.bf16.mxu0 0
    %411 = vmatpush1.bf16.msra.mxu0 %v330
    %412 = vmatprep.subr.bf16.mxu0 0
    %413 = vmatpush1.bf16.msra.mxu0 %v331
    %414 = vmatprep.subr.bf16.mxu0 0
    %415 = vmatpush1.bf16.msra.mxu0 %v332
    %416 = vmatprep.subr.bf16.mxu0 0
    %417 = vmatpush1.bf16.msra.mxu0 %v333
    %418 = vmatprep.subr.bf16.mxu0 0
    %419 = vmatpush1.bf16.msra.mxu0 %v334
    %420 = vmatprep.subr.bf16.mxu0 0
    %421 = vmatpush1.bf16.msra.mxu0 %v335
    %422 = vmatprep.subr.bf16.mxu0 0
    %423 = vmatpush1.bf16.msra.mxu0 %v336
    %424 = vmatprep.subr.bf16.mxu0 0
    %425 = vmatpush1.bf16.msra.mxu0 %v337
    %426 = vmatprep.mubr.bf16.mxu0 %v129
    %427 = vmatmul.mubr.bf16.gmra.mrb[0].mxu0 %v128
    %v428 = vpop.f32.mrb[0].mxu0
    %v429 = vadd.f32 %v198, %v428
    %v430 = vpop.f32.mrb[0].mxu0
    %v431 = vpop.f32.mrb[0].mxu0
    %v432 = vpop.f32.mrb[0].mxu0
    %433 = vdwg.mxu0
    %434 = vmatprep.subr.bf16.mxu0 0
    %435 = vmatpush1.bf16.msra.mxu0 %v338
    %436 = vmatprep.subr.bf16.mxu0 0
    %437 = vmatpush1.bf16.msra.mxu0 %v339
    %438 = vmatprep.subr.bf16.mxu0 0
    %439 = vmatpush1.bf16.msra.mxu0 %v340
    %440 = vmatprep.subr.bf16.mxu0 0
    %441 = vmatpush1.bf16.msra.mxu0 %v341
    %442 = vmatprep.subr.bf16.mxu0 0
    %443 = vmatpush1.bf16.msra.mxu0 %v342
    %444 = vmatprep.subr.bf16.mxu0 0
    %445 = vmatpush1.bf16.msra.mxu0 %v343
    %446 = vmatprep.subr.bf16.mxu0 0
    %447 = vmatpush1.bf16.msra.mxu0 %v344
    %448 = vmatprep.subr.bf16.mxu0 0
    %449 = vmatpush1.bf16.msra.mxu0 %v345
    %450 = vmatprep.subr.bf16.mxu0 0
    %451 = vmatpush1.bf16.msra.mxu0 %v346
    %452 = vmatprep.subr.bf16.mxu0 0
    %453 = vmatpush1.bf16.msra.mxu0 %v347
    %454 = vmatprep.subr.bf16.mxu0 0
    %455 = vmatpush1.bf16.msra.mxu0 %v348
    %456 = vmatprep.subr.bf16.mxu0 0
    %457 = vmatpush1.bf16.msra.mxu0 %v349
    %458 = vmatprep.subr.bf16.mxu0 0
    %459 = vmatpush1.bf16.msra.mxu0 %v350
    %460 = vmatprep.subr.bf16.mxu0 0
    %461 = vmatpush1.bf16.msra.mxu0 %v351
    %462 = vmatprep.subr.bf16.mxu0 0
    %463 = vmatpush1.bf16.msra.mxu0 %v392
    %464 = vmatprep.subr.bf16.mxu0 0
    %465 = vmatpush1.bf16.msra.mxu0 0
    %466 = vmatprep.mubr.bf16.mxu0 %v385
    %467 = vmatmul.mubr.bf16.gmra.mrb[0].mxu0 %v130
    %v468 = vpop.f32.mrb[0].mxu0
    %v469 = vadd.f32 %v429, %v468
    %v470 = vpop.f32.mrb[0].mxu0
    %v471 = vpop.f32.mrb[0].mxu0
    %v472 = vpop.f32.mrb[0].mxu0
    %473 = vdwg.mxu0
    %v474 = vmax.f32 %v469, 0.0
    %v475 = vpack.c.bf16 %v474, %v474
    %v476 = vld [vmem:[#allocation6] sm:$0xf]
    %v477 = vld [vmem:[#allocation6 + $0x4] sm:$0xf]
    %v478 = vld [vmem:[#allocation6 + $0x8] sm:$0xf]
    %v479 = vld [vmem:[#allocation6 + $0xc] sm:$0xf]
    %v480 = vld [vmem:[#allocation6 + $0x10] sm:$0xf]
    %v481 = vld [vmem:[#allocation6 + $0x14] sm:$0xf]
    %v482 = vld [vmem:[#allocation6 + $0x18] sm:$0xf]
    %v483 = vld [vmem:[#allocation6 + $0x1c] sm:$0xf]
    %v484 = vld [vmem:[#allocation6 + $0x20] sm:$0xf]
    %v485 = vld [vmem:[#allocation6 + $0x24] sm:$0xf]
    %v486 = vld [vmem:[#allocation6 + $0x28] sm:$0xf]
    %v487 = vld [vmem:[#allocation6 + $0x2c] sm:$0xf]
    %v488 = vld [vmem:[#allocation6 + $0x30] sm:$0xf]
    %v489 = vld [vmem:[#allocation6 + $0x34] sm:$0xf]
    %v490 = vld [vmem:[#allocation6 + $0x38] sm:$0xf]
    %v491 = vld [vmem:[#allocation6 + $0x3c] sm:$0xf]
    %v492 = vld [vmem:[%s4] sm:$0x1]
    %v494 = vlaneseq
    %v495 = vshrl.u32 %v494, 7
    %v496 = vsub.s32 0, %v495
    %v497 = vrot.slane %v492, %v496
    %v515 = vunpack.c.l.b16 %v476
    %v516 = vunpack.c.l.b16 %v477
    %v517 = vunpack.c.l.b16 %v478
    %v518 = vunpack.c.l.b16 %v479
    %v519 = vunpack.c.l.b16 %v480
    %v520 = vunpack.c.l.b16 %v481
    %v521 = vunpack.c.l.b16 %v482
    %v522 = vunpack.c.l.b16 %v483
    %v523 = vunpack.c.l.b16 %v484
    %v524 = vunpack.c.l.b16 %v485
    %v525 = vunpack.c.l.b16 %v486
    %v526 = vunpack.c.l.b16 %v487
    %v527 = vunpack.c.l.b16 %v488
    %v528 = vunpack.c.l.b16 %v489
    %v529 = vunpack.c.l.b16 %v490
    %v530 = vunpack.c.l.b16 %v491
    %v531 = vpack.c.b16 %v516, %v515
    %v532 = vpack.c.b16 %v518, %v517
    %v533 = vpack.c.b16 %v520, %v519
    %v534 = vpack.c.b16 %v522, %v521
    %v535 = vpack.c.b16 %v524, %v523
    %v536 = vpack.c.b16 %v526, %v525
    %v537 = vpack.c.b16 %v528, %v527
    %v538 = vpack.c.b16 %v530, %v529
    %547 = vmatprep.subr.bf16.mxu0 0
    %548 = vmatpush1.bf16.msra.mxu0 %v531
    %549 = vmatprep.subr.bf16.mxu0 0
    %550 = vmatpush1.bf16.msra.mxu0 %v532
    %551 = vmatprep.subr.bf16.mxu0 0
    %552 = vmatpush1.bf16.msra.mxu0 %v533
    %553 = vmatprep.subr.bf16.mxu0 0
    %554 = vmatpush1.bf16.msra.mxu0 %v534
    %555 = vmatprep.subr.bf16.mxu0 0
    %556 = vmatpush1.bf16.msra.mxu0 %v535
    %557 = vmatprep.subr.bf16.mxu0 0
    %558 = vmatpush1.bf16.msra.mxu0 %v536
    %559 = vmatprep.subr.bf16.mxu0 0
    %560 = vmatpush1.bf16.msra.mxu0 %v537
    %561 = vmatprep.subr.bf16.mxu0 0
    %562 = vmatpush1.bf16.msra.mxu0 %v538
    %563 = vmatprep.subr.bf16.mxu0 0
    %564 = vmatpush1.bf16.msra.mxu0 0
    %565 = vmatprep.subr.bf16.mxu0 0
    %566 = vmatpush1.bf16.msra.mxu0 0
    %567 = vmatprep.subr.bf16.mxu0 0
    %568 = vmatpush1.bf16.msra.mxu0 0
    %569 = vmatprep.subr.bf16.mxu0 0
    %570 = vmatpush1.bf16.msra.mxu0 0
    %571 = vmatprep.subr.bf16.mxu0 0
    %572 = vmatpush1.bf16.msra.mxu0 0
    %573 = vmatprep.subr.bf16.mxu0 0
    %574 = vmatpush1.bf16.msra.mxu0 0
    %575 = vmatprep.subr.bf16.mxu0 0
    %576 = vmatpush1.bf16.msra.mxu0 0
    %577 = vmatprep.subr.bf16.mxu0 0
    %578 = vmatpush1.bf16.msra.mxu0 0
    %579 = vmatprep.mubr.bf16.mxu0 0
    %580 = vmatmul.mubr.bf16.gmra.mrb[0].mxu0 %v475
    %v581 = vpop.f32.mrb[0].mxu0
    %v582 = vadd.f32 %v497, %v581
    %v583 = vpop.f32.mrb[0].mxu0
    %v584 = vpop.f32.mrb[0].mxu0
    %v585 = vpop.f32.mrb[0].mxu0
    %586 = vdwg.mxu0
    %v587 = vmax.f32 %v582, 0.0
    %v588 = vpack.c.bf16 %v587, %v587
    %v589 = vld [vmem:[#allocation7] sm:$0xf]
    %v590 = vld [vmem:[#allocation7 + $0x4] sm:$0xf]
    %v591 = vld [vmem:[#allocation7 + $0x8] sm:$0xf]
    %v592 = vld [vmem:[#allocation7 + $0xc] sm:$0xf]
    %v593 = vld [vmem:[#allocation7 + $0x10] sm:$0xf]
    %v594 = vld [vmem:[#allocation7 + $0x14] sm:$0xf]
    %v595 = vld [vmem:[#allocation7 + $0x18] sm:$0xf]
    %v596 = vld [vmem:[#allocation7 + $0x1c] sm:$0xf]
    %v597 = vld [vmem:[#allocation7 + $0x20] sm:$0xf]
    %v598 = vld [vmem:[#allocation7 + $0x24] sm:$0xf]
    %v599 = vld [vmem:[#allocation7 + $0x28] sm:$0xf]
    %v600 = vld [vmem:[#allocation7 + $0x2c] sm:$0xf]
    %v601 = vld [vmem:[#allocation7 + $0x30] sm:$0xf]
    %v602 = vld [vmem:[#allocation7 + $0x34] sm:$0xf]
    %v603 = vld [vmem:[#allocation7 + $0x38] sm:$0xf]
    %v604 = vld [vmem:[#allocation7 + $0x3c] sm:$0xf]
    %v605 = vld [vmem:[%s6] sm:$0x1]
    %v607 = vlaneseq
    %v608 = vshrl.u32 %v607, 7
    %v609 = vsub.s32 0, %v608
    %v610 = vrot.slane %v605, %v609
    %v628 = vunpack.c.l.b16 %v589
    %v629 = vunpack.c.l.b16 %v590
    %v630 = vunpack.c.l.b16 %v591
    %v631 = vunpack.c.l.b16 %v592
    %v632 = vunpack.c.l.b16 %v593
    %v633 = vunpack.c.l.b16 %v594
    %v634 = vunpack.c.l.b16 %v595
    %v635 = vunpack.c.l.b16 %v596
    %v636 = vunpack.c.l.b16 %v597
    %v637 = vunpack.c.l.b16 %v598
    %v638 = vunpack.c.l.b16 %v599
    %v639 = vunpack.c.l.b16 %v600
    %v640 = vunpack.c.l.b16 %v601
    %v641 = vunpack.c.l.b16 %v602
    %v642 = vunpack.c.l.b16 %v603
    %v643 = vunpack.c.l.b16 %v604
    %v644 = vpack.c.b16 %v629, %v628
    %v645 = vpack.c.b16 %v631, %v630
    %v646 = vpack.c.b16 %v633, %v632
    %v647 = vpack.c.b16 %v635, %v634
    %v648 = vpack.c.b16 %v637, %v636
    %v649 = vpack.c.b16 %v639, %v638
    %v650 = vpack.c.b16 %v641, %v640
    %v651 = vpack.c.b16 %v643, %v642
    %660 = vmatprep.subr.bf16.mxu0 0
    %661 = vmatpush1.bf16.msra.mxu0 %v644
    %662 = vmatprep.subr.bf16.mxu0 0
    %663 = vmatpush1.bf16.msra.mxu0 %v645
    %664 = vmatprep.subr.bf16.mxu0 0
    %665 = vmatpush1.bf16.msra.mxu0 %v646
    %666 = vmatprep.subr.bf16.mxu0 0
    %667 = vmatpush1.bf16.msra.mxu0 %v647
    %668 = vmatprep.subr.bf16.mxu0 0
    %669 = vmatpush1.bf16.msra.mxu0 %v648
    %670 = vmatprep.subr.bf16.mxu0 0
    %671 = vmatpush1.bf16.msra.mxu0 %v649
    %672 = vmatprep.subr.bf16.mxu0 0
    %673 = vmatpush1.bf16.msra.mxu0 %v650
    %674 = vmatprep.subr.bf16.mxu0 0
    %675 = vmatpush1.bf16.msra.mxu0 %v651
    %676 = vmatprep.subr.bf16.mxu0 0
    %677 = vmatpush1.bf16.msra.mxu0 0
    %678 = vmatprep.subr.bf16.mxu0 0
    %679 = vmatpush1.bf16.msra.mxu0 0
    %680 = vmatprep.subr.bf16.mxu0 0
    %681 = vmatpush1.bf16.msra.mxu0 0
    %682 = vmatprep.subr.bf16.mxu0 0
    %683 = vmatpush1.bf16.msra.mxu0 0
    %684 = vmatprep.subr.bf16.mxu0 0
    %685 = vmatpush1.bf16.msra.mxu0 0
    %686 = vmatprep.subr.bf16.mxu0 0
    %687 = vmatpush1.bf16.msra.mxu0 0
    %688 = vmatprep.subr.bf16.mxu0 0
    %689 = vmatpush1.bf16.msra.mxu0 0
    %690 = vmatprep.subr.bf16.mxu0 0
    %691 = vmatpush1.bf16.msra.mxu0 0
    %692 = vmatprep.mubr.bf16.mxu0 0
    %693 = vmatmul.mubr.bf16.gmra.mrb[0].mxu0 %v588
    %v694 = vpop.f32.mrb[0].mxu0
    %v695 = vadd.f32 %v610, %v694
    %v696 = vpop.f32.mrb[0].mxu0
    %v697 = vpop.f32.mrb[0].mxu0
    %v698 = vpop.f32.mrb[0].mxu0
    %699 = vdwg.mxu0
    %700 = vst [vmem:[#allocation9] sm:$0xff] %v695
    // Predicated region
    $region46: #{_forward_pallas.1} parent=1 // pred_check
      _
    $region47: #{_forward_pallas.1} parent=1 // pred_check_branch
      %702 = sbr.rel (0) target = $region49
    $region48: #{_forward_pallas.1} parent=1 // pred_region
      // Predicated region
      $region50: #{_forward_pallas.1} parent=48 // pred_check
        _
      $region51: #{_forward_pallas.1} parent=48 // pred_check_branch
        %704 = sbr.rel (0) target = $region53
      $region52: #{_forward_pallas.1} parent=48 // pred_region
        // Predicated region
        $region54: #{_forward_pallas.1} parent=52 // pred_check
          _
        $region55: #{_forward_pallas.1} parent=52 // pred_check_branch
          %706 = sbr.rel target = $region57
        $region56: #{_forward_pallas.1} parent=52 // pred_region
          // Predicated region
          $region69: #{_forward_pallas.1} parent=56 // pred_check
            _
          $region70: #{_forward_pallas.1} parent=56 // pred_check_branch
            %721 = sbr.rel (0) target = $region72
          $region71: #{_forward_pallas.1} parent=56 // pred_region
            loop: start=0, step=1, limit=1
            $region73: #{_forward_pallas.1} parent=71 // loop_pre_header
              _
            $region74: #{_forward_pallas.1} parent=71 // loop_header
              %s724 = sphi 0, %s728
              %p725 = scmp.ge.s32.totalorder %s724, 1
              %s729 = sphi [#allocation9], [#allocation9]
              %s730 = sphi %s7, %s7
            $region75: #{_forward_pallas.1} parent=71 // loop_header_branch
              %727 = sbr.rel (%p725) target = $region79
            $region76: #{_forward_pallas.1} parent=71 // loop_body
              %v731 = vld [vmem:[%s729] sm:$0x3]
              %732 = vst [vmem:[%s730] sm:$0x3] %v731
            $region77: #{_forward_pallas.1} parent=71 // loop_footer
              %s728 = sadd.s32 1, %s724
            $region78: #{_forward_pallas.1} parent=71 // loop_footer_branch
              %723 = sbr.rel target = $region74
            $region79: #{_forward_pallas.1} parent=71 // loop_exit
              _
          $region72: #{_forward_pallas.1} parent=56 // pred_fallthru
            _
        $region57: #{_forward_pallas.1} parent=52 // pred_fallthru
          _
        // Predicated region
        $region58: #{_forward_pallas.1} parent=52 // pred_check
          _
        $region59: #{_forward_pallas.1} parent=52 // pred_check_branch
          %708 = sbr.rel (0) target = $region61
        $region60: #{_forward_pallas.1} parent=52 // pred_region
          loop: start=0, step=1, limit=1
          $region62: #{_forward_pallas.1} parent=60 // loop_pre_header
            _
          $region63: #{_forward_pallas.1} parent=60 // loop_header
            %s711 = sphi 0, %s715
            %p712 = scmp.ge.s32.totalorder %s711, 1
            %s716 = sphi [#allocation9], [#allocation9]
            %s717 = sphi %s7, %s7
          $region64: #{_forward_pallas.1} parent=60 // loop_header_branch
            %714 = sbr.rel (%p712) target = $region68
          $region65: #{_forward_pallas.1} parent=60 // loop_body
            %v718 = vld [vmem:[%s716] sm:$0x3]
            %719 = vst [vmem:[%s717] sm:$0x3] %v718
          $region66: #{_forward_pallas.1} parent=60 // loop_footer
            %s715 = sadd.s32 1, %s711
          $region67: #{_forward_pallas.1} parent=60 // loop_footer_branch
            %710 = sbr.rel target = $region63
          $region68: #{_forward_pallas.1} parent=60 // loop_exit
            _
        $region61: #{_forward_pallas.1} parent=52 // pred_fallthru
          _
      $region53: #{_forward_pallas.1} parent=48 // pred_fallthru
        _
      %733 = vnop
    $region49: #{_forward_pallas.1} parent=1 // pred_fallthru
      _
    // Predicated region
    $region80: #{_forward_pallas.1} parent=1 // pred_check
      _
    $region81: #{_forward_pallas.1} parent=1 // pred_check_branch
      %735 = sbr.rel (0) target = $region83
    $region82: #{_forward_pallas.1} parent=1 // pred_region
      _
    $region83: #{_forward_pallas.1} parent=1 // pred_fallthru
      _
    %736 = vsyncpa [#allocation3], 1
    %737 = vsyncpa [#allocation5], 1
    %738 = vsyncpa [#allocation8], 1

</llo_original>
